<compile_context>
chip_gen: v6e
topology: v6e:2x2x1
jax: 0.10.0
libtpu: 0.0.40
codegen_flags: <defaults>
</compile_context>

<pallas_src>
import jax
import jax.numpy as jnp
from jax import lax
from jax.experimental import pallas as pl
from jax.experimental.pallas import tpu as pltpu

H_OUT = 28  # forced by the module (see note above)


# ---------------------------------------------------------------------------
# Pallas kernel: one fused matmul  out^T = W_eff^T @ X^T + b_eff
# ---------------------------------------------------------------------------
def encoder_kernel(x_ref, w_ref, b_ref, o_ref):
    acc = jnp.dot(w_ref[...], x_ref[...], preferred_element_type=jnp.float32)
    o_ref[...] = (acc + b_ref[...]).astype(o_ref.dtype)


# ---------------------------------------------------------------------------
# Wrapper glue (indexing only; no FLOPs besides the tiny weight pre-fusion)
# ---------------------------------------------------------------------------
def _upsample_nearest_cf(x_cf, s):
    # nearest upsample on channel-first (C, B, H, W); matches
    # nn.Upsample(scale_factor=s) default 'nearest' for integer s.
    return jnp.repeat(jnp.repeat(x_cf, s, axis=2), s, axis=3)


def _branch_tap_rows(x_cf, s, dil, cin, m):
    # the 9 shifted VALID-window slices of the s-upsampled image, each
    # flattened to (Cin, M); row order within the branch = (tap, channel).
    xu = _upsample_nearest_cf(x_cf, s)
    rows = []
    for ki in range(3):
        for kj in range(3):
            sl = xu[:, :, dil * ki:dil * ki + H_OUT, dil * kj:dil * kj + H_OUT]
            rows.append(sl.reshape(cin, m))
    return rows


def encoder_forward(x_nchw, params):
    B, Cin, H, W = x_nchw.shape
    assert H == H_OUT and W == H_OUT, "Encoder requires 28x28 input"
    Cout = params["b1"].shape[0]
    M = B * H_OUT * H_OUT
    K = (1 + 3 * 9) * Cin  # 28 * Cin

    # ---- activation slab X^T: (K, M); channels/taps on sublanes, M on lanes ----
    x_cf = jnp.transpose(x_nchw, (1, 0, 2, 3)).astype(jnp.float32)   # (Cin,B,H,W)
    rows = [x_cf.reshape(Cin, M)]                                    # 1x1 branch
    rows += _branch_tap_rows(x_cf, 2, 14, Cin, M)                    # dilation 14
    rows += _branch_tap_rows(x_cf, 3, 28, Cin, M)                    # dilation 28
    rows += _branch_tap_rows(x_cf, 4, 42, Cin, M)                    # dilation 42
    x_slab = jnp.concatenate(rows, axis=0).astype(jnp.bfloat16)      # (K, M)

    # ---- fused weight W_eff^T: (Cout, K) and fused bias: (Cout, 1) ----
    wo = jnp.transpose(params["Wo"][:, :, 0, 0], (1, 0))             # (4*Cout, Cout)
    wo_blk = [wo[i * Cout:(i + 1) * Cout, :] for i in range(4)]      # (Cout, Cout) each

    w1 = jnp.transpose(params["W1"][:, :, 0, 0], (1, 0))             # (Cin, Cout)

    def taps_w(Wb):  # OIHW (Cout,Cin,3,3) -> (9*Cin, Cout); rows = (tap, channel)
        return jnp.transpose(Wb.reshape(Cout, Cin, 9), (2, 1, 0)).reshape(9 * Cin, Cout)

    w_eff = jnp.concatenate([
        w1 @ wo_blk[0],
        taps_w(params["W2"]) @ wo_blk[1],
        taps_w(params["W3"]) @ wo_blk[2],
        taps_w(params["W4"]) @ wo_blk[3],
    ], axis=0)                                                        # (K, Cout)
    w_eff_t = jnp.transpose(w_eff, (1, 0)).astype(jnp.bfloat16)       # (Cout, K)

    b_eff = (params["bo"]
             + params["b1"] @ wo_blk[0]
             + params["b2"] @ wo_blk[1]
             + params["b3"] @ wo_blk[2]
             + params["b4"] @ wo_blk[3]).astype(jnp.float32).reshape(Cout, 1)

    # ---- single-step Pallas call: 3 consolidated inputs, full-extent blocks ----
    out_t = pl.pallas_call(
        encoder_kernel,
        out_shape=jax.ShapeDtypeStruct((Cout, M), jnp.float32),
        grid_spec=pltpu.PrefetchScalarGridSpec(
            num_scalar_prefetch=0,
            grid=(1,),
            in_specs=[
                pl.BlockSpec((K, M), lambda i: (0, 0)),       # activation slab
                pl.BlockSpec((Cout, K), lambda i: (0, 0)),    # fused weight
                pl.BlockSpec((Cout, 1), lambda i: (0, 0)),    # fused bias
            ],
            out_specs=pl.BlockSpec((Cout, M), lambda i: (0, 0)),
        ),
        compiler_params=pltpu.CompilerParams(
            dimension_semantics=("arbitrary",)),
    )(x_slab, w_eff_t, b_eff)

    out = out_t.reshape(Cout, B, H_OUT, H_OUT)
    return jnp.transpose(out, (1, 0, 2, 3))  # back to NCHW


# ---------------------------------------------------------------------------
# Pure-JAX reference (lax.conv_general_dilated) for correctness check
# ---------------------------------------------------------------------------
def _upsample_nearest_nhwc(x_nhwc, s):
    return jnp.repeat(jnp.repeat(x_nhwc, s, axis=1), s, axis=2)


def reference_forward(x_nchw, params):
    x = jnp.transpose(x_nchw, (0, 2, 3, 1)).astype(jnp.float32)

    def conv(inp, Wm, b, dil):
        w_hwio = jnp.transpose(Wm, (2, 3, 1, 0))
        y = lax.conv_general_dilated(inp, w_hwio, (1, 1), "VALID",
                                     rhs_dilation=(dil, dil),
                                     dimension_numbers=("NHWC", "HWIO", "NHWC"))
        return y + b

    x1 = conv(x, params["W1"], params["b1"], 1)
    x2 = conv(_upsample_nearest_nhwc(x, 2), params["W2"], params["b2"], 14)
    x3 = conv(_upsample_nearest_nhwc(x, 3), params["W3"], params["b3"], 28)
    x4 = conv(_upsample_nearest_nhwc(x, 4), params["W4"], params["b4"], 42)
    cat = jnp.concatenate([x1, x2, x3, x4], axis=-1)
    out = conv(cat, params["Wo"], params["bo"], 1)
    return jnp.transpose(out, (0, 3, 1, 2))


if __name__ == "__main__":
    key = jax.random.PRNGKey(0)
    B, Cin, Cout = 2, 4, 8
    ks = jax.random.split(key, 11)

    params = {
        "W1": 0.1 * jax.random.normal(ks[0], (Cout, Cin, 1, 1), jnp.float32),
        "b1": 0.1 * jax.random.normal(ks[1], (Cout,), jnp.float32),
        "W2": 0.1 * jax.random.normal(ks[2], (Cout, Cin, 3, 3), jnp.float32),
        "b2": 0.1 * jax.random.normal(ks[3], (Cout,), jnp.float32),
        "W3": 0.1 * jax.random.normal(ks[4], (Cout, Cin, 3, 3), jnp.float32),
        "b3": 0.1 * jax.random.normal(ks[5], (Cout,), jnp.float32),
        "W4": 0.1 * jax.random.normal(ks[6], (Cout, Cin, 3, 3), jnp.float32),
        "b4": 0.1 * jax.random.normal(ks[7], (Cout,), jnp.float32),
        "Wo": 0.1 * jax.random.normal(ks[8], (Cout, 4 * Cout, 1, 1), jnp.float32),
        "bo": 0.1 * jax.random.normal(ks[9], (Cout,), jnp.float32),
    }

    # NCHW input; spatial 28x28 is forced by the architecture's concat constraint
    x = jax.random.normal(ks[10], (B, Cin, H_OUT, H_OUT), jnp.float32)

    out = jax.block_until_ready(encoder_forward(x, params))
    ref = jax.block_until_ready(reference_forward(x, params))

    assert out.shape == (B, Cout, H_OUT, H_OUT), out.shape
    # bf16 matmul operands (f32 accumulation) -> bf16-appropriate tolerance
    if not bool(jnp.allclose(out, ref, atol=3e-2, rtol=3e-2)):
        raise AssertionError("Pallas kernel output mismatch vs JAX reference")
    print("KERNEL_OK")
</pallas_src>

<mosaic_0001>
module attributes {stable_mosaic.version = 11 : i64} {
  func.func @encoder_kernel(%arg0: i32, %arg1: memref<112x1568xbf16, #tpu.memory_space<vmem>>, %arg2: memref<8x112xbf16, #tpu.memory_space<vmem>>, %arg3: memref<8x1xf32, #tpu.memory_space<vmem>>, %arg4: memref<8x1568xf32, #tpu.memory_space<vmem>>) attributes {dimension_semantics = [#tpu.dimension_semantics<arbitrary>], iteration_bounds = array<i64: 1>, scalar_prefetch = 0 : i64, scratch_operands = 0 : i64, tpu.core_type = #tpu.core_type<tc>, window_params = [{pipeline_mode = #tpu.pipeline_mode<synchronous>, transform_indices = @transform_0, window_bounds = array<i64: 112, 1568>}, {pipeline_mode = #tpu.pipeline_mode<synchronous>, transform_indices = @transform_1, window_bounds = array<i64: 8, 112>}, {pipeline_mode = #tpu.pipeline_mode<synchronous>, transform_indices = @transform_2, window_bounds = array<i64: 8, 1>}, {pipeline_mode = #tpu.pipeline_mode<synchronous>, transform_indices = @transform_3, window_bounds = array<i64: 8, 1568>}]} {
    %c0 = arith.constant 0 : index
    %c0_0 = arith.constant 0 : index
    %0 = vector.load %arg2[%c0, %c0_0] : memref<8x112xbf16, #tpu.memory_space<vmem>>, vector<8x112xbf16>
    %c0_1 = arith.constant 0 : index
    %c0_2 = arith.constant 0 : index
    %1 = vector.load %arg1[%c0_1, %c0_2] : memref<112x1568xbf16, #tpu.memory_space<vmem>>, vector<112x1568xbf16>
    %cst = arith.constant dense<0.000000e+00> : vector<8x1568xf32>
    %2 = tpu.matmul %0, %1, %cst {dimension_numbers = #tpu.dot_dimension_numbers<[1], [0], [0], [1], [0, 0, 1, 1], [], []>} : vector<8x112xbf16>, vector<112x1568xbf16>, vector<8x1568xf32> -> vector<8x1568xf32>
    %c0_3 = arith.constant 0 : index
    %c0_4 = arith.constant 0 : index
    %3 = vector.load %arg3[%c0_3, %c0_4] : memref<8x1xf32, #tpu.memory_space<vmem>>, vector<8x1xf32>
    %4 = vector.broadcast %3 : vector<8x1xf32> to vector<8x1568xf32>
    %5 = arith.addf %2, %4 : vector<8x1568xf32>
    %c0_5 = arith.constant 0 : index
    %c0_6 = arith.constant 0 : index
    %6 = vector.load %arg4[%c0_5, %c0_6] : memref<8x1568xf32, #tpu.memory_space<vmem>>, vector<8x1568xf32>
    tpu.vector_store %arg4[%c0_5, %c0_6], %5 {strides = array<i32>} : memref<8x1568xf32, #tpu.memory_space<vmem>>, vector<8x1568xf32>,
    return
  }
  func.func @transform_0(%arg0: i32) -> (i32, i32) {
    %c0_i32 = arith.constant 0 : i32
    %c0_i32_0 = arith.constant 0 : i32
    %c0_i32_1 = arith.constant 0 : i32
    return %c0_i32, %c0_i32_0 : i32, i32
  }
  func.func @transform_1(%arg0: i32) -> (i32, i32) {
    %c0_i32 = arith.constant 0 : i32
    %c0_i32_0 = arith.constant 0 : i32
    %c0_i32_1 = arith.constant 0 : i32
    return %c0_i32, %c0_i32_0 : i32, i32
  }
  func.func @transform_2(%arg0: i32) -> (i32, i32) {
    %c0_i32 = arith.constant 0 : i32
    %c0_i32_0 = arith.constant 0 : i32
    %c0_i32_1 = arith.constant 0 : i32
    return %c0_i32, %c0_i32_0 : i32, i32
  }
  func.func @transform_3(%arg0: i32) -> (i32, i32) {
    %c0_i32 = arith.constant 0 : i32
    %c0_i32_0 = arith.constant 0 : i32
    %c0_i32_1 = arith.constant 0 : i32
    return %c0_i32, %c0_i32_0 : i32, i32
  }
}

</mosaic_0001>

<llo_original>
// kernel: tpu_custom_call.1
$region0: #{tpu_custom_call.1}
  #allocation0 [shape = 'u32[]', space=smem, size = 0x4, offset = 0x4, fixed_abs, tag = 'smem constant byte address 0x4 - core index']
  #allocation1 [shape = 'u32[144,128]{1,0:T(1,128)}', space=vmem, size = 0x12000, scoped, tag = 'internal scratch']
  %s0 = inlined_call_operand.hbm [shape: bf16[112,1568], index: 0, kind: input, shape index: {}]
  %s1 = inlined_call_operand.vmem [shape: bf16[8,112], index: 1, kind: input, shape index: {}]
  %s2 = inlined_call_operand.vmem [shape: f32[8,1], index: 2, kind: input, shape index: {}]
  %s3 = inlined_call_operand.hbm [shape: f32[8,1568], index: 3, kind: output, shape index: {}]
  %s4 = sld [smem:[#allocation0]]
  $region26: #{tpu_custom_call.1} parent=0
    _
  %s6 = ssub.s32 1, %s4
  %s7 = scalar_select 0, %s6, %s4
  $region1: #{tpu_custom_call.1} parent=0
    #allocation2 [shape = 'u8[372736]{0}', space=vmem, size = 0x5b000, scoped, tag = 'input window, operand 0, single buffered']
    #allocation3 [shape = 's32[1]{0}', space=sflag, size = 0x4, scoped, tag = 'scoped memory for tpu_custom_call.1']
    #allocation4 [shape = 's32[1]{0}', space=sflag, size = 0x4, scoped, tag = 'scoped memory for tpu_custom_call.1']
    #allocation5 [shape = 'u8[53248]{0}', space=vmem, size = 0xd000, scoped, tag = 'output window, operand 0, single buffered']
    %8 = vsyncpa [#allocation3], 0
    %9 = vsyncpa [#allocation4], 0
    // Predicated region
    $region2: #{tpu_custom_call.1} parent=1 // pred_check
      _
    $region3: #{tpu_custom_call.1} parent=1 // pred_check_branch
      %11 = sbr.rel (0) target = $region5
    $region4: #{tpu_custom_call.1} parent=1 // pred_region
      %s13 = ssub.s32 11648, 11648
      %14 = vsyncadd [#allocation3], %s13
      %s15 = sshll.u32 [#allocation2], 4
      %s16 = int_to_ptr.vmem [resolvable:$true] %s15
      %21 = dma.hbm_to_vmem [thread:$0]  %s0, 11648, %s16, [#allocation3], 832, 832, 52
    $region5: #{tpu_custom_call.1} parent=1 // pred_fallthru
      _
    // Predicated region
    $region6: #{tpu_custom_call.1} parent=1 // pred_check
      _
    $region7: #{tpu_custom_call.1} parent=1 // pred_check_branch
      %23 = sbr.rel (0) target = $region9
    $region8: #{tpu_custom_call.1} parent=1 // pred_region
      _
    $region9: #{tpu_custom_call.1} parent=1 // pred_fallthru
      _
    // Predicated region
    $region10: #{tpu_custom_call.1} parent=1 // pred_check
      _
    $region11: #{tpu_custom_call.1} parent=1 // pred_check_branch
      %25 = sbr.rel (0) target = $region13
    $region12: #{tpu_custom_call.1} parent=1 // pred_region
      _
    $region13: #{tpu_custom_call.1} parent=1 // pred_fallthru
      _
    // Predicated region
    $region14: #{tpu_custom_call.1} parent=1 // pred_check
      _
    $region15: #{tpu_custom_call.1} parent=1 // pred_check_branch
      %27 = sbr.rel (0) target = $region17
    $region16: #{tpu_custom_call.1} parent=1 // pred_region
      %28 = dma.done [#allocation3], 11648
    $region17: #{tpu_custom_call.1} parent=1 // pred_fallthru
      _
    %v30 = vld [vmem:[%s1] sm:$0xf]
    %v31 = vld [vmem:[#allocation2] sm:$0xff]
    %v32 = vld [vmem:[#allocation2 + $0x8] sm:$0xff]
    %v33 = vld [vmem:[#allocation2 + $0x10] sm:$0xff]
    %v34 = vld [vmem:[#allocation2 + $0x18] sm:$0xff]
    %v35 = vld [vmem:[#allocation2 + $0x20] sm:$0xff]
    %v36 = vld [vmem:[#allocation2 + $0x28] sm:$0xff]
    %v37 = vld [vmem:[#allocation2 + $0x30] sm:$0xf]
    %v38 = vld [vmem:[#allocation2 + $0x34] sm:$0xff]
    %v39 = vld [vmem:[#allocation2 + $0x3c] sm:$0xff]
    %v40 = vld [vmem:[#allocation2 + $0x44] sm:$0xff]
    %v41 = vld [vmem:[#allocation2 + $0x4c] sm:$0xff]
    %v42 = vld [vmem:[#allocation2 + $0x54] sm:$0xff]
    %v43 = vld [vmem:[#allocation2 + $0x5c] sm:$0xff]
    %v44 = vld [vmem:[#allocation2 + $0x64] sm:$0xf]
    %v45 = vld [vmem:[#allocation2 + $0x68] sm:$0xff]
    %v46 = vld [vmem:[#allocation2 + $0x70] sm:$0xff]
    %v47 = vld [vmem:[#allocation2 + $0x78] sm:$0xff]
    %v48 = vld [vmem:[#allocation2 + $0x80] sm:$0xff]
    %v49 = vld [vmem:[#allocation2 + $0x88] sm:$0xff]
    %v50 = vld [vmem:[#allocation2 + $0x90] sm:$0xff]
    %v51 = vld [vmem:[#allocation2 + $0x98] sm:$0xf]
    %v52 = vld [vmem:[#allocation2 + $0x9c] sm:$0xff]
    %v53 = vld [vmem:[#allocation2 + $0xa4] sm:$0xff]
    %v54 = vld [vmem:[#allocation2 + $0xac] sm:$0xff]
    %v55 = vld [vmem:[#allocation2 + $0xb4] sm:$0xff]
    %v56 = vld [vmem:[#allocation2 + $0xbc] sm:$0xff]
    %v57 = vld [vmem:[#allocation2 + $0xc4] sm:$0xff]
    %v58 = vld [vmem:[#allocation2 + $0xcc] sm:$0xf]
    %v59 = vld [vmem:[#allocation2 + $0xd0] sm:$0xff]
    %v60 = vld [vmem:[#allocation2 + $0xd8] sm:$0xff]
    %v61 = vld [vmem:[#allocation2 + $0xe0] sm:$0xff]
    %v62 = vld [vmem:[#allocation2 + $0xe8] sm:$0xff]
    %v63 = vld [vmem:[#allocation2 + $0xf0] sm:$0xff]
    %v64 = vld [vmem:[#allocation2 + $0xf8] sm:$0xff]
    %v65 = vld [vmem:[#allocation2 + $0x100] sm:$0xf]
    %v66 = vld [vmem:[#allocation2 + $0x104] sm:$0xff]
    %v67 = vld [vmem:[#allocation2 + $0x10c] sm:$0xff]
    %v68 = vld [vmem:[#allocation2 + $0x114] sm:$0xff]
    %v69 = vld [vmem:[#allocation2 + $0x11c] sm:$0xff]
    %v70 = vld [vmem:[#allocation2 + $0x124] sm:$0xff]
    %v71 = vld [vmem:[#allocation2 + $0x12c] sm:$0xff]
    %v72 = vld [vmem:[#allocation2 + $0x134] sm:$0xf]
    %v73 = vld [vmem:[#allocation2 + $0x138] sm:$0xff]
    %v74 = vld [vmem:[#allocation2 + $0x140] sm:$0xff]
    %v75 = vld [vmem:[#allocation2 + $0x148] sm:$0xff]
    %v76 = vld [vmem:[#allocation2 + $0x150] sm:$0xff]
    %v77 = vld [vmem:[#allocation2 + $0x158] sm:$0xff]
    %v78 = vld [vmem:[#allocation2 + $0x160] sm:$0xff]
    %v79 = vld [vmem:[#allocation2 + $0x168] sm:$0xf]
    %v80 = vld [vmem:[#allocation2 + $0x16c] sm:$0xff]
    %v81 = vld [vmem:[#allocation2 + $0x174] sm:$0xff]
    %v82 = vld [vmem:[#allocation2 + $0x17c] sm:$0xff]
    %v83 = vld [vmem:[#allocation2 + $0x184] sm:$0xff]
    %v84 = vld [vmem:[#allocation2 + $0x18c] sm:$0xff]
    %v85 = vld [vmem:[#allocation2 + $0x194] sm:$0xff]
    %v86 = vld [vmem:[#allocation2 + $0x19c] sm:$0xf]
    %v87 = vld [vmem:[#allocation2 + $0x1a0] sm:$0xff]
    %v88 = vld [vmem:[#allocation2 + $0x1a8] sm:$0xff]
    %v89 = vld [vmem:[#allocation2 + $0x1b0] sm:$0xff]
    %v90 = vld [vmem:[#allocation2 + $0x1b8] sm:$0xff]
    %v91 = vld [vmem:[#allocation2 + $0x1c0] sm:$0xff]
    %v92 = vld [vmem:[#allocation2 + $0x1c8] sm:$0xff]
    %v93 = vld [vmem:[#allocation2 + $0x1d0] sm:$0xf]
    %v94 = vld [vmem:[#allocation2 + $0x1d4] sm:$0xff]
    %v95 = vld [vmem:[#allocation2 + $0x1dc] sm:$0xff]
    %v96 = vld [vmem:[#allocation2 + $0x1e4] sm:$0xff]
    %v97 = vld [vmem:[#allocation2 + $0x1ec] sm:$0xff]
    %v98 = vld [vmem:[#allocation2 + $0x1f4] sm:$0xff]
    %v99 = vld [vmem:[#allocation2 + $0x1fc] sm:$0xff]
    %v100 = vld [vmem:[#allocation2 + $0x204] sm:$0xf]
    %v101 = vld [vmem:[#allocation2 + $0x208] sm:$0xff]
    %v102 = vld [vmem:[#allocation2 + $0x210] sm:$0xff]
    %v103 = vld [vmem:[#allocation2 + $0x218] sm:$0xff]
    %v104 = vld [vmem:[#allocation2 + $0x220] sm:$0xff]
    %v105 = vld [vmem:[#allocation2 + $0x228] sm:$0xff]
    %v106 = vld [vmem:[#allocation2 + $0x230] sm:$0xff]
    %v107 = vld [vmem:[#allocation2 + $0x238] sm:$0xf]
    %v108 = vld [vmem:[#allocation2 + $0x23c] sm:$0xff]
    %v109 = vld [vmem:[#allocation2 + $0x244] sm:$0xff]
    %v110 = vld [vmem:[#allocation2 + $0x24c] sm:$0xff]
    %v111 = vld [vmem:[#allocation2 + $0x254] sm:$0xff]
    %v112 = vld [vmem:[#allocation2 + $0x25c] sm:$0xff]
    %v113 = vld [vmem:[#allocation2 + $0x264] sm:$0xff]
    %v114 = vld [vmem:[#allocation2 + $0x26c] sm:$0xf]
    %v115 = vld [vmem:[#allocation2 + $0x270] sm:$0xff]
    %v116 = vld [vmem:[#allocation2 + $0x278] sm:$0xff]
    %v117 = vld [vmem:[#allocation2 + $0x280] sm:$0xff]
    %v118 = vld [vmem:[#allocation2 + $0x288] sm:$0xff]
    %v119 = vld [vmem:[#allocation2 + $0x290] sm:$0xff]
    %v120 = vld [vmem:[#allocation2 + $0x298] sm:$0xff]
    %v121 = vld [vmem:[#allocation2 + $0x2a0] sm:$0xf]
    %v122 = vld [vmem:[#allocation2 + $0x2a4] sm:$0xff]
    %v123 = vld [vmem:[#allocation2 + $0x2ac] sm:$0xff]
    %v124 = vld [vmem:[#allocation2 + $0x2b4] sm:$0xff]
    %v125 = vld [vmem:[#allocation2 + $0x2bc] sm:$0xff]
    %v126 = vld [vmem:[#allocation2 + $0x2c4] sm:$0xff]
    %v127 = vld [vmem:[#allocation2 + $0x2cc] sm:$0xff]
    %v128 = vld [vmem:[#allocation2 + $0x2d4] sm:$0xf]
    %v129 = vld [vmem:[%s2] sm:$0xff]
    %131 = vset.pattern.permute.xlu0 0
    %132 = vperm.xlu0 %131, %v129
    %v133 = vpop.permute.xlu0 %132
    %v233 = vunpack.c.l.b16 %v31
    %v234 = vunpack.c.h.b16 %v31
    %v235 = vunpack.c.l.b16 %v32
    %v236 = vunpack.c.h.b16 %v32
    %v237 = vunpack.c.l.b16 %v33
    %v238 = vunpack.c.h.b16 %v33
    %v239 = vunpack.c.l.b16 %v34
    %v240 = vunpack.c.h.b16 %v34
    %v241 = vunpack.c.l.b16 %v35
    %v242 = vunpack.c.h.b16 %v35
    %v243 = vunpack.c.l.b16 %v36
    %v244 = vunpack.c.h.b16 %v36
    %v245 = vunpack.c.l.b16 %v37
    %v246 = vunpack.c.l.b16 %v38
    %v247 = vunpack.c.h.b16 %v38
    %v248 = vunpack.c.l.b16 %v39
    %v249 = vunpack.c.h.b16 %v39
    %v250 = vunpack.c.l.b16 %v40
    %v251 = vunpack.c.h.b16 %v40
    %v252 = vunpack.c.l.b16 %v41
    %v253 = vunpack.c.h.b16 %v41
    %v254 = vunpack.c.l.b16 %v42
    %v255 = vunpack.c.h.b16 %v42
    %v256 = vunpack.c.l.b16 %v43
    %v257 = vunpack.c.h.b16 %v43
    %v258 = vunpack.c.l.b16 %v44
    %v259 = vunpack.c.l.b16 %v45
    %v260 = vunpack.c.h.b16 %v45
    %v261 = vunpack.c.l.b16 %v46
    %v262 = vunpack.c.h.b16 %v46
    %v263 = vunpack.c.l.b16 %v47
    %v264 = vunpack.c.h.b16 %v47
    %v265 = vunpack.c.l.b16 %v48
    %v266 = vunpack.c.h.b16 %v48
    %v267 = vunpack.c.l.b16 %v49
    %v268 = vunpack.c.h.b16 %v49
    %v269 = vunpack.c.l.b16 %v50
    %v270 = vunpack.c.h.b16 %v50
    %v271 = vunpack.c.l.b16 %v51
    %v272 = vunpack.c.l.b16 %v52
    %v273 = vunpack.c.h.b16 %v52
    %v274 = vunpack.c.l.b16 %v53
    %v275 = vunpack.c.h.b16 %v53
    %v276 = vunpack.c.l.b16 %v54
    %v277 = vunpack.c.h.b16 %v54
    %v278 = vunpack.c.l.b16 %v55
    %v279 = vunpack.c.h.b16 %v55
    %v280 = vunpack.c.l.b16 %v56
    %v281 = vunpack.c.h.b16 %v56
    %v282 = vunpack.c.l.b16 %v57
    %v283 = vunpack.c.h.b16 %v57
    %v284 = vunpack.c.l.b16 %v58
    %v285 = vunpack.c.l.b16 %v59
    %v286 = vunpack.c.h.b16 %v59
    %v287 = vunpack.c.l.b16 %v60
    %v288 = vunpack.c.h.b16 %v60
    %v289 = vunpack.c.l.b16 %v61
    %v290 = vunpack.c.h.b16 %v61
    %v291 = vunpack.c.l.b16 %v62
    %v292 = vunpack.c.h.b16 %v62
    %v293 = vunpack.c.l.b16 %v63
    %v294 = vunpack.c.h.b16 %v63
    %v295 = vunpack.c.l.b16 %v64
    %v296 = vunpack.c.h.b16 %v64
    %v297 = vunpack.c.l.b16 %v65
    %v298 = vunpack.c.l.b16 %v66
    %v299 = vunpack.c.h.b16 %v66
    %v300 = vunpack.c.l.b16 %v67
    %v301 = vunpack.c.h.b16 %v67
    %v302 = vunpack.c.l.b16 %v68
    %v303 = vunpack.c.h.b16 %v68
    %v304 = vunpack.c.l.b16 %v69
    %v305 = vunpack.c.h.b16 %v69
    %v306 = vunpack.c.l.b16 %v70
    %v307 = vunpack.c.h.b16 %v70
    %v308 = vunpack.c.l.b16 %v71
    %v309 = vunpack.c.h.b16 %v71
    %v310 = vunpack.c.l.b16 %v72
    %v311 = vunpack.c.l.b16 %v73
    %v312 = vunpack.c.h.b16 %v73
    %v313 = vunpack.c.l.b16 %v74
    %v314 = vunpack.c.h.b16 %v74
    %v315 = vunpack.c.l.b16 %v75
    %v316 = vunpack.c.h.b16 %v75
    %v317 = vunpack.c.l.b16 %v76
    %v318 = vunpack.c.h.b16 %v76
    %v319 = vunpack.c.l.b16 %v77
    %v320 = vunpack.c.h.b16 %v77
    %v321 = vunpack.c.l.b16 %v78
    %v322 = vunpack.c.h.b16 %v78
    %v323 = vunpack.c.l.b16 %v79
    %v324 = vunpack.c.l.b16 %v80
    %v325 = vunpack.c.h.b16 %v80
    %v326 = vunpack.c.l.b16 %v81
    %v327 = vunpack.c.h.b16 %v81
    %v328 = vunpack.c.l.b16 %v82
    %v329 = vunpack.c.h.b16 %v82
    %v330 = vunpack.c.l.b16 %v83
    %v331 = vunpack.c.h.b16 %v83
    %v332 = vunpack.c.l.b16 %v84
    %v333 = vunpack.c.h.b16 %v84
    %v334 = vunpack.c.l.b16 %v85
    %v335 = vunpack.c.h.b16 %v85
    %v336 = vunpack.c.l.b16 %v86
    %v337 = vunpack.c.l.b16 %v87
    %v338 = vunpack.c.h.b16 %v87
    %v339 = vunpack.c.l.b16 %v88
    %v340 = vunpack.c.h.b16 %v88
    %v341 = vunpack.c.l.b16 %v89
    %v342 = vunpack.c.h.b16 %v89
    %v343 = vunpack.c.l.b16 %v90
    %v344 = vunpack.c.h.b16 %v90
    %v345 = vunpack.c.l.b16 %v91
    %v346 = vunpack.c.h.b16 %v91
    %v347 = vunpack.c.l.b16 %v92
    %v348 = vunpack.c.h.b16 %v92
    %v349 = vunpack.c.l.b16 %v93
    %v350 = vunpack.c.l.b16 %v94
    %v351 = vunpack.c.h.b16 %v94
    %v352 = vunpack.c.l.b16 %v95
    %v353 = vunpack.c.h.b16 %v95
    %v354 = vunpack.c.l.b16 %v96
    %v355 = vunpack.c.h.b16 %v96
    %v356 = vunpack.c.l.b16 %v97
    %v357 = vunpack.c.h.b16 %v97
    %v358 = vunpack.c.l.b16 %v98
    %v359 = vunpack.c.h.b16 %v98
    %v360 = vunpack.c.l.b16 %v99
    %v361 = vunpack.c.h.b16 %v99
    %v362 = vunpack.c.l.b16 %v100
    %v363 = vunpack.c.l.b16 %v101
    %v364 = vunpack.c.h.b16 %v101
    %v365 = vunpack.c.l.b16 %v102
    %v366 = vunpack.c.h.b16 %v102
    %v367 = vunpack.c.l.b16 %v103
    %v368 = vunpack.c.h.b16 %v103
    %v369 = vunpack.c.l.b16 %v104
    %v370 = vunpack.c.h.b16 %v104
    %v371 = vunpack.c.l.b16 %v105
    %v372 = vunpack.c.h.b16 %v105
    %v373 = vunpack.c.l.b16 %v106
    %v374 = vunpack.c.h.b16 %v106
    %v375 = vunpack.c.l.b16 %v107
    %v376 = vunpack.c.l.b16 %v108
    %v377 = vunpack.c.h.b16 %v108
    %v378 = vunpack.c.l.b16 %v109
    %v379 = vunpack.c.h.b16 %v109
    %v380 = vunpack.c.l.b16 %v110
    %v381 = vunpack.c.h.b16 %v110
    %v382 = vunpack.c.l.b16 %v111
    %v383 = vunpack.c.h.b16 %v111
    %v384 = vunpack.c.l.b16 %v112
    %v385 = vunpack.c.h.b16 %v112
    %v386 = vunpack.c.l.b16 %v113
    %v387 = vunpack.c.h.b16 %v113
    %v388 = vunpack.c.l.b16 %v114
    %v389 = vunpack.c.l.b16 %v115
    %v390 = vunpack.c.h.b16 %v115
    %v391 = vunpack.c.l.b16 %v116
    %v392 = vunpack.c.h.b16 %v116
    %v393 = vunpack.c.l.b16 %v117
    %v394 = vunpack.c.h.b16 %v117
    %v395 = vunpack.c.l.b16 %v118
    %v396 = vunpack.c.h.b16 %v118
    %v397 = vunpack.c.l.b16 %v119
    %v398 = vunpack.c.h.b16 %v119
    %v399 = vunpack.c.l.b16 %v120
    %v400 = vunpack.c.h.b16 %v120
    %v401 = vunpack.c.l.b16 %v121
    %v402 = vunpack.c.l.b16 %v122
    %v403 = vunpack.c.h.b16 %v122
    %v404 = vunpack.c.l.b16 %v123
    %v405 = vunpack.c.h.b16 %v123
    %v406 = vunpack.c.l.b16 %v124
    %v407 = vunpack.c.h.b16 %v124
    %v408 = vunpack.c.l.b16 %v125
    %v409 = vunpack.c.h.b16 %v125
    %v410 = vunpack.c.l.b16 %v126
    %v411 = vunpack.c.h.b16 %v126
    %v412 = vunpack.c.l.b16 %v127
    %v413 = vunpack.c.h.b16 %v127
    %v414 = vunpack.c.l.b16 %v128
    %v415 = vpack.c.b16 %v246, %v233
    %v416 = vpack.c.b16 %v247, %v234
    %v417 = vpack.c.b16 %v248, %v235
    %v418 = vpack.c.b16 %v249, %v236
    %v419 = vpack.c.b16 %v250, %v237
    %v420 = vpack.c.b16 %v251, %v238
    %v421 = vpack.c.b16 %v252, %v239
    %v422 = vpack.c.b16 %v253, %v240
    %v423 = vpack.c.b16 %v254, %v241
    %v424 = vpack.c.b16 %v255, %v242
    %v425 = vpack.c.b16 %v256, %v243
    %v426 = vpack.c.b16 %v257, %v244
    %v427 = vpack.c.b16 %v258, %v245
    %v428 = vpack.c.b16 %v272, %v259
    %v429 = vpack.c.b16 %v273, %v260
    %v430 = vpack.c.b16 %v274, %v261
    %v431 = vpack.c.b16 %v275, %v262
    %v432 = vpack.c.b16 %v276, %v263
    %v433 = vpack.c.b16 %v277, %v264
    %v434 = vpack.c.b16 %v278, %v265
    %v435 = vpack.c.b16 %v279, %v266
    %v436 = vpack.c.b16 %v280, %v267
    %v437 = vpack.c.b16 %v281, %v268
    %v438 = vpack.c.b16 %v282, %v269
    %v439 = vpack.c.b16 %v283, %v270
    %v440 = vpack.c.b16 %v284, %v271
    %v441 = vpack.c.b16 %v298, %v285
    %v442 = vpack.c.b16 %v299, %v286
    %v443 = vpack.c.b16 %v300, %v287
    %v444 = vpack.c.b16 %v301, %v288
    %v445 = vpack.c.b16 %v302, %v289
    %v446 = vpack.c.b16 %v303, %v290
    %v447 = vpack.c.b16 %v304, %v291
    %v448 = vpack.c.b16 %v305, %v292
    %v449 = vpack.c.b16 %v306, %v293
    %v450 = vpack.c.b16 %v307, %v294
    %v451 = vpack.c.b16 %v308, %v295
    %v452 = vpack.c.b16 %v309, %v296
    %v453 = vpack.c.b16 %v310, %v297
    %v454 = vpack.c.b16 %v324, %v311
    %v455 = vpack.c.b16 %v325, %v312
    %v456 = vpack.c.b16 %v326, %v313
    %v457 = vpack.c.b16 %v327, %v314
    %v458 = vpack.c.b16 %v328, %v315
    %v459 = vpack.c.b16 %v329, %v316
    %v460 = vpack.c.b16 %v330, %v317
    %v461 = vpack.c.b16 %v331, %v318
    %v462 = vpack.c.b16 %v332, %v319
    %v463 = vpack.c.b16 %v333, %v320
    %v464 = vpack.c.b16 %v334, %v321
    %v465 = vpack.c.b16 %v335, %v322
    %v466 = vpack.c.b16 %v336, %v323
    %v467 = vpack.c.b16 %v350, %v337
    %v468 = vpack.c.b16 %v351, %v338
    %v469 = vpack.c.b16 %v352, %v339
    %v470 = vpack.c.b16 %v353, %v340
    %v471 = vpack.c.b16 %v354, %v341
    %v472 = vpack.c.b16 %v355, %v342
    %v473 = vpack.c.b16 %v356, %v343
    %v474 = vpack.c.b16 %v357, %v344
    %v475 = vpack.c.b16 %v358, %v345
    %v476 = vpack.c.b16 %v359, %v346
    %v477 = vpack.c.b16 %v360, %v347
    %v478 = vpack.c.b16 %v361, %v348
    %v479 = vpack.c.b16 %v362, %v349
    %v480 = vpack.c.b16 %v376, %v363
    %v481 = vpack.c.b16 %v377, %v364
    %v482 = vpack.c.b16 %v378, %v365
    %v483 = vpack.c.b16 %v379, %v366
    %v484 = vpack.c.b16 %v380, %v367
    %v485 = vpack.c.b16 %v381, %v368
    %v486 = vpack.c.b16 %v382, %v369
    %v487 = vpack.c.b16 %v383, %v370
    %v488 = vpack.c.b16 %v384, %v371
    %v489 = vpack.c.b16 %v385, %v372
    %v490 = vpack.c.b16 %v386, %v373
    %v491 = vpack.c.b16 %v387, %v374
    %v492 = vpack.c.b16 %v388, %v375
    %v493 = vpack.c.b16 %v402, %v389
    %v494 = vpack.c.b16 %v403, %v390
    %v495 = vpack.c.b16 %v404, %v391
    %v496 = vpack.c.b16 %v405, %v392
    %v497 = vpack.c.b16 %v406, %v393
    %v498 = vpack.c.b16 %v407, %v394
    %v499 = vpack.c.b16 %v408, %v395
    %v500 = vpack.c.b16 %v409, %v396
    %v501 = vpack.c.b16 %v410, %v397
    %v502 = vpack.c.b16 %v411, %v398
    %v503 = vpack.c.b16 %v412, %v399
    %v504 = vpack.c.b16 %v413, %v400
    %v505 = vpack.c.b16 %v414, %v401
    %vm597 = vcmask 916480
    %v599 = vsel %vm597, %v30, 0
    %601 = vmatprep.subr.bf16.mxu0 0
    %602 = vmatpush1.bf16.msra.mxu0 0
    %603 = vmatprep.subr.bf16.mxu0 %v494
    %604 = vmatpush1.bf16.msra.mxu0 %v493
    %605 = vmatprep.subr.bf16.mxu0 %v481
    %606 = vmatpush1.bf16.msra.mxu0 %v480
    %607 = vmatprep.subr.bf16.mxu0 %v468
    %608 = vmatpush1.bf16.msra.mxu0 %v467
    %609 = vmatprep.subr.bf16.mxu0 %v455
    %610 = vmatpush1.bf16.msra.mxu0 %v454
    %611 = vmatprep.subr.bf16.mxu0 %v442
    %612 = vmatpush1.bf16.msra.mxu0 %v441
    %613 = vmatprep.subr.bf16.mxu0 %v429
    %614 = vmatpush1.bf16.msra.mxu0 %v428
    %615 = vmatprep.subr.bf16.mxu0 %v416
    %616 = vmatpush1.bf16.msra.mxu0 %v415
    %617 = vmatprep.subr.bf16.mxu0 0
    %618 = vmatpush2.bf16.msra.mxu0 0
    %619 = vmatprep.subr.bf16.mxu0 0
    %620 = vmatpush2.bf16.msra.mxu0 0
    %621 = vmatprep.subr.bf16.mxu0 0
    %622 = vmatpush2.bf16.msra.mxu0 0
    %623 = vmatprep.subr.bf16.mxu0 0
    %624 = vmatpush2.bf16.msra.mxu0 0
    %625 = vmatprep.subr.bf16.mxu0 0
    %626 = vmatpush2.bf16.msra.mxu0 0
    %627 = vmatprep.subr.bf16.mxu0 0
    %628 = vmatpush2.bf16.msra.mxu0 0
    %629 = vmatprep.subr.bf16.mxu0 0
    %630 = vmatpush2.bf16.msra.mxu0 0
    %631 = vmatprep.subr.bf16.mxu0 0
    %632 = vmatpush2.bf16.msra.mxu0 0
    %633 = vmatprep.mubr.bf16.mxu0 0
    %634 = vmatmul.mubr.bf16.gmra.mxu0 %v599
    %v635 = vpop.f32.mrf.mxu0
    %v636 = vadd.f32 %v133, %v635
    %v637 = vpop.f32.mrf.mxu0
    %v638 = vadd.f32 %v133, %v637
    %v639 = vpop.f32.mrf.mxu0
    %v640 = vpop.f32.mrf.mxu0
    %641 = vdwg.mxu0
    %642 = vmatprep.subr.bf16.mxu0 0
    %643 = vmatpush1.bf16.msra.mxu0 0
    %644 = vmatprep.subr.bf16.mxu0 %v496
    %645 = vmatpush1.bf16.msra.mxu0 %v495
    %646 = vmatprep.subr.bf16.mxu0 %v483
    %647 = vmatpush1.bf16.msra.mxu0 %v482
    %648 = vmatprep.subr.bf16.mxu0 %v470
    %649 = vmatpush1.bf16.msra.mxu0 %v469
    %650 = vmatprep.subr.bf16.mxu0 %v457
    %651 = vmatpush1.bf16.msra.mxu0 %v456
    %652 = vmatprep.subr.bf16.mxu0 %v444
    %653 = vmatpush1.bf16.msra.mxu0 %v443
    %654 = vmatprep.subr.bf16.mxu0 %v431
    %655 = vmatpush1.bf16.msra.mxu0 %v430
    %656 = vmatprep.subr.bf16.mxu0 %v418
    %657 = vmatpush1.bf16.msra.mxu0 %v417
    %658 = vmatprep.subr.bf16.mxu0 0
    %659 = vmatpush2.bf16.msra.mxu0 0
    %660 = vmatprep.subr.bf16.mxu0 0
    %661 = vmatpush2.bf16.msra.mxu0 0
    %662 = vmatprep.subr.bf16.mxu0 0
    %663 = vmatpush2.bf16.msra.mxu0 0
    %664 = vmatprep.subr.bf16.mxu0 0
    %665 = vmatpush2.bf16.msra.mxu0 0
    %666 = vmatprep.subr.bf16.mxu0 0
    %667 = vmatpush2.bf16.msra.mxu0 0
    %668 = vmatprep.subr.bf16.mxu0 0
    %669 = vmatpush2.bf16.msra.mxu0 0
    %670 = vmatprep.subr.bf16.mxu0 0
    %671 = vmatpush2.bf16.msra.mxu0 0
    %672 = vmatprep.subr.bf16.mxu0 0
    %673 = vmatpush2.bf16.msra.mxu0 0
    %674 = vmatprep.mubr.bf16.mxu0 0
    %675 = vmatmul.mubr.bf16.gmra.mxu0 %v599
    %v676 = vpop.f32.mrf.mxu0
    %v677 = vadd.f32 %v133, %v676
    %v678 = vpop.f32.mrf.mxu0
    %v679 = vadd.f32 %v133, %v678
    %v680 = vpop.f32.mrf.mxu0
    %v681 = vpop.f32.mrf.mxu0
    %682 = vdwg.mxu0
    %683 = vmatprep.subr.bf16.mxu0 0
    %684 = vmatpush1.bf16.msra.mxu0 0
    %685 = vmatprep.subr.bf16.mxu0 %v498
    %686 = vmatpush1.bf16.msra.mxu0 %v497
    %687 = vmatprep.subr.bf16.mxu0 %v485
    %688 = vmatpush1.bf16.msra.mxu0 %v484
    %689 = vmatprep.subr.bf16.mxu0 %v472
    %690 = vmatpush1.bf16.msra.mxu0 %v471
    %691 = vmatprep.subr.bf16.mxu0 %v459
    %692 = vmatpush1.bf16.msra.mxu0 %v458
    %693 = vmatprep.subr.bf16.mxu0 %v446
    %694 = vmatpush1.bf16.msra.mxu0 %v445
    %695 = vmatprep.subr.bf16.mxu0 %v433
    %696 = vmatpush1.bf16.msra.mxu0 %v432
    %697 = vmatprep.subr.bf16.mxu0 %v420
    %698 = vmatpush1.bf16.msra.mxu0 %v419
    %699 = vmatprep.subr.bf16.mxu0 0
    %700 = vmatpush2.bf16.msra.mxu0 0
    %701 = vmatprep.subr.bf16.mxu0 0
    %702 = vmatpush2.bf16.msra.mxu0 0
    %703 = vmatprep.subr.bf16.mxu0 0
    %704 = vmatpush2.bf16.msra.mxu0 0
    %705 = vmatprep.subr.bf16.mxu0 0
    %706 = vmatpush2.bf16.msra.mxu0 0
    %707 = vmatprep.subr.bf16.mxu0 0
    %708 = vmatpush2.bf16.msra.mxu0 0
    %709 = vmatprep.subr.bf16.mxu0 0
    %710 = vmatpush2.bf16.msra.mxu0 0
    %711 = vmatprep.subr.bf16.mxu0 0
    %712 = vmatpush2.bf16.msra.mxu0 0
    %713 = vmatprep.subr.bf16.mxu0 0
    %714 = vmatpush2.bf16.msra.mxu0 0
    %715 = vmatprep.mubr.bf16.mxu0 0
    %716 = vmatmul.mubr.bf16.gmra.mxu0 %v599
    %v717 = vpop.f32.mrf.mxu0
    %v718 = vadd.f32 %v133, %v717
    %v719 = vpop.f32.mrf.mxu0
    %v720 = vadd.f32 %v133, %v719
    %v721 = vpop.f32.mrf.mxu0
    %v722 = vpop.f32.mrf.mxu0
    %723 = vdwg.mxu0
    %724 = vmatprep.subr.bf16.mxu0 0
    %725 = vmatpush1.bf16.msra.mxu0 0
    %726 = vmatprep.subr.bf16.mxu0 %v500
    %727 = vmatpush1.bf16.msra.mxu0 %v499
    %728 = vmatprep.subr.bf16.mxu0 %v487
    %729 = vmatpush1.bf16.msra.mxu0 %v486
    %730 = vmatprep.subr.bf16.mxu0 %v474
    %731 = vmatpush1.bf16.msra.mxu0 %v473
    %732 = vmatprep.subr.bf16.mxu0 %v461
    %733 = vmatpush1.bf16.msra.mxu0 %v460
    %734 = vmatprep.subr.bf16.mxu0 %v448
    %735 = vmatpush1.bf16.msra.mxu0 %v447
    %736 = vmatprep.subr.bf16.mxu0 %v435
    %737 = vmatpush1.bf16.msra.mxu0 %v434
    %738 = vmatprep.subr.bf16.mxu0 %v422
    %739 = vmatpush1.bf16.msra.mxu0 %v421
    %740 = vmatprep.subr.bf16.mxu0 0
    %741 = vmatpush2.bf16.msra.mxu0 0
    %742 = vmatprep.subr.bf16.mxu0 0
    %743 = vmatpush2.bf16.msra.mxu0 0
    %744 = vmatprep.subr.bf16.mxu0 0
    %745 = vmatpush2.bf16.msra.mxu0 0
    %746 = vmatprep.subr.bf16.mxu0 0
    %747 = vmatpush2.bf16.msra.mxu0 0
    %748 = vmatprep.subr.bf16.mxu0 0
    %749 = vmatpush2.bf16.msra.mxu0 0
    %750 = vmatprep.subr.bf16.mxu0 0
    %751 = vmatpush2.bf16.msra.mxu0 0
    %752 = vmatprep.subr.bf16.mxu0 0
    %753 = vmatpush2.bf16.msra.mxu0 0
    %754 = vmatprep.subr.bf16.mxu0 0
    %755 = vmatpush2.bf16.msra.mxu0 0
    %756 = vmatprep.mubr.bf16.mxu0 0
    %757 = vmatmul.mubr.bf16.gmra.mxu0 %v599
    %v758 = vpop.f32.mrf.mxu0
    %v759 = vadd.f32 %v133, %v758
    %v760 = vpop.f32.mrf.mxu0
    %v761 = vadd.f32 %v133, %v760
    %v762 = vpop.f32.mrf.mxu0
    %v763 = vpop.f32.mrf.mxu0
    %764 = vdwg.mxu0
    %765 = vmatprep.subr.bf16.mxu0 0
    %766 = vmatpush1.bf16.msra.mxu0 0
    %767 = vmatprep.subr.bf16.mxu0 %v502
    %768 = vmatpush1.bf16.msra.mxu0 %v501
    %769 = vmatprep.subr.bf16.mxu0 %v489
    %770 = vmatpush1.bf16.msra.mxu0 %v488
    %771 = vmatprep.subr.bf16.mxu0 %v476
    %772 = vmatpush1.bf16.msra.mxu0 %v475
    %773 = vmatprep.subr.bf16.mxu0 %v463
    %774 = vmatpush1.bf16.msra.mxu0 %v462
    %775 = vmatprep.subr.bf16.mxu0 %v450
    %776 = vmatpush1.bf16.msra.mxu0 %v449
    %777 = vmatprep.subr.bf16.mxu0 %v437
    %778 = vmatpush1.bf16.msra.mxu0 %v436
    %779 = vmatprep.subr.bf16.mxu0 %v424
    %780 = vmatpush1.bf16.msra.mxu0 %v423
    %781 = vmatprep.subr.bf16.mxu0 0
    %782 = vmatpush2.bf16.msra.mxu0 0
    %783 = vmatprep.subr.bf16.mxu0 0
    %784 = vmatpush2.bf16.msra.mxu0 0
    %785 = vmatprep.subr.bf16.mxu0 0
    %786 = vmatpush2.bf16.msra.mxu0 0
    %787 = vmatprep.subr.bf16.mxu0 0
    %788 = vmatpush2.bf16.msra.mxu0 0
    %789 = vmatprep.subr.bf16.mxu0 0
    %790 = vmatpush2.bf16.msra.mxu0 0
    %791 = vmatprep.subr.bf16.mxu0 0
    %792 = vmatpush2.bf16.msra.mxu0 0
    %793 = vmatprep.subr.bf16.mxu0 0
    %794 = vmatpush2.bf16.msra.mxu0 0
    %795 = vmatprep.subr.bf16.mxu0 0
    %796 = vmatpush2.bf16.msra.mxu0 0
    %797 = vmatprep.mubr.bf16.mxu0 0
    %798 = vmatmul.mubr.bf16.gmra.mxu0 %v599
    %v799 = vpop.f32.mrf.mxu0
    %v800 = vadd.f32 %v133, %v799
    %v801 = vpop.f32.mrf.mxu0
    %v802 = vadd.f32 %v133, %v801
    %v803 = vpop.f32.mrf.mxu0
    %v804 = vpop.f32.mrf.mxu0
    %805 = vdwg.mxu0
    %806 = vmatprep.subr.bf16.mxu0 0
    %807 = vmatpush1.bf16.msra.mxu0 0
    %808 = vmatprep.subr.bf16.mxu0 %v504
    %809 = vmatpush1.bf16.msra.mxu0 %v503
    %810 = vmatprep.subr.bf16.mxu0 %v491
    %811 = vmatpush1.bf16.msra.mxu0 %v490
    %812 = vmatprep.subr.bf16.mxu0 %v478
    %813 = vmatpush1.bf16.msra.mxu0 %v477
    %814 = vmatprep.subr.bf16.mxu0 %v465
    %815 = vmatpush1.bf16.msra.mxu0 %v464
    %816 = vmatprep.subr.bf16.mxu0 %v452
    %817 = vmatpush1.bf16.msra.mxu0 %v451
    %818 = vmatprep.subr.bf16.mxu0 %v439
    %819 = vmatpush1.bf16.msra.mxu0 %v438
    %820 = vmatprep.subr.bf16.mxu0 %v426
    %821 = vmatpush1.bf16.msra.mxu0 %v425
    %822 = vmatprep.subr.bf16.mxu0 0
    %823 = vmatpush2.bf16.msra.mxu0 0
    %824 = vmatprep.subr.bf16.mxu0 0
    %825 = vmatpush2.bf16.msra.mxu0 0
    %826 = vmatprep.subr.bf16.mxu0 0
    %827 = vmatpush2.bf16.msra.mxu0 0
    %828 = vmatprep.subr.bf16.mxu0 0
    %829 = vmatpush2.bf16.msra.mxu0 0
    %830 = vmatprep.subr.bf16.mxu0 0
    %831 = vmatpush2.bf16.msra.mxu0 0
    %832 = vmatprep.subr.bf16.mxu0 0
    %833 = vmatpush2.bf16.msra.mxu0 0
    %834 = vmatprep.subr.bf16.mxu0 0
    %835 = vmatpush2.bf16.msra.mxu0 0
    %836 = vmatprep.subr.bf16.mxu0 0
    %837 = vmatpush2.bf16.msra.mxu0 0
    %838 = vmatprep.mubr.bf16.mxu0 0
    %839 = vmatmul.mubr.bf16.gmra.mxu0 %v599
    %v840 = vpop.f32.mrf.mxu0
    %v841 = vadd.f32 %v133, %v840
    %v842 = vpop.f32.mrf.mxu0
    %v843 = vadd.f32 %v133, %v842
    %v844 = vpop.f32.mrf.mxu0
    %v845 = vpop.f32.mrf.mxu0
    %846 = vdwg.mxu0
    %847 = vmatprep.subr.bf16.mxu0 0
    %848 = vmatpush1.bf16.msra.mxu0 0
    %849 = vmatprep.subr.bf16.mxu0 0
    %850 = vmatpush1.bf16.msra.mxu0 %v505
    %851 = vmatprep.subr.bf16.mxu0 0
    %852 = vmatpush1.bf16.msra.mxu0 %v492
    %853 = vmatprep.subr.bf16.mxu0 0
    %854 = vmatpush1.bf16.msra.mxu0 %v479
    %855 = vmatprep.subr.bf16.mxu0 0
    %856 = vmatpush1.bf16.msra.mxu0 %v466
    %857 = vmatprep.subr.bf16.mxu0 0
    %858 = vmatpush1.bf16.msra.mxu0 %v453
    %859 = vmatprep.subr.bf16.mxu0 0
    %860 = vmatpush1.bf16.msra.mxu0 %v440
    %861 = vmatprep.subr.bf16.mxu0 0
    %862 = vmatpush1.bf16.msra.mxu0 %v427
    %863 = vmatprep.subr.bf16.mxu0 0
    %864 = vmatpush2.bf16.msra.mxu0 0
    %865 = vmatprep.subr.bf16.mxu0 0
    %866 = vmatpush2.bf16.msra.mxu0 0
    %867 = vmatprep.subr.bf16.mxu0 0
    %868 = vmatpush2.bf16.msra.mxu0 0
    %869 = vmatprep.subr.bf16.mxu0 0
    %870 = vmatpush2.bf16.msra.mxu0 0
    %871 = vmatprep.subr.bf16.mxu0 0
    %872 = vmatpush2.bf16.msra.mxu0 0
    %873 = vmatprep.subr.bf16.mxu0 0
    %874 = vmatpush2.bf16.msra.mxu0 0
    %875 = vmatprep.subr.bf16.mxu0 0
    %876 = vmatpush2.bf16.msra.mxu0 0
    %877 = vmatprep.subr.bf16.mxu0 0
    %878 = vmatpush2.bf16.msra.mxu0 0
    %879 = vmatprep.mubr.bf16.mxu0 0
    %880 = vmatmul.mubr.bf16.gmra.mxu0 %v599
    %v881 = vpop.f32.mrf.mxu0
    %v882 = vadd.f32 %v133, %v881
    %v883 = vpop.f32.mrf.mxu0
    %v884 = vpop.f32.mrf.mxu0
    %v885 = vpop.f32.mrf.mxu0
    %886 = vdwg.mxu0
    %887 = vst [vmem:[#allocation5] sm:$0xff] %v636
    %888 = vst [vmem:[#allocation5 + $0x8] sm:$0xff] %v638
    %889 = vst [vmem:[#allocation5 + $0x10] sm:$0xff] %v677
    %890 = vst [vmem:[#allocation5 + $0x18] sm:$0xff] %v679
    %891 = vst [vmem:[#allocation5 + $0x20] sm:$0xff] %v718
    %892 = vst [vmem:[#allocation5 + $0x28] sm:$0xff] %v720
    %893 = vst [vmem:[#allocation5 + $0x30] sm:$0xff] %v759
    %894 = vst [vmem:[#allocation5 + $0x38] sm:$0xff] %v761
    %895 = vst [vmem:[#allocation5 + $0x40] sm:$0xff] %v800
    %896 = vst [vmem:[#allocation5 + $0x48] sm:$0xff] %v802
    %897 = vst [vmem:[#allocation5 + $0x50] sm:$0xff] %v841
    %898 = vst [vmem:[#allocation5 + $0x58] sm:$0xff] %v843
    %vm899 = vcmask 261120
    %900 = vst.msk [vmem:[#allocation5 + $0x60] sm:$0xff] %vm899, %v882
    // Predicated region
    $region18: #{tpu_custom_call.1} parent=1 // pred_check
      _
    $region19: #{tpu_custom_call.1} parent=1 // pred_check_branch
      %902 = sbr.rel (0) target = $region21
    $region20: #{tpu_custom_call.1} parent=1 // pred_region
      %s904 = ssub.s32 1664, 1664
      %905 = vsyncadd [#allocation4], %s904
      %s907 = sshll.u32 [#allocation5], 4
      %s908 = int_to_ptr.vmem [resolvable:$true] %s907
      %910 = dma.vmem_to_hbm [thread:$0]  %s908, 1664, %s3, [#allocation4]
    $region21: #{tpu_custom_call.1} parent=1 // pred_fallthru
      _
    // Predicated region
    $region22: #{tpu_custom_call.1} parent=1 // pred_check
      _
    $region23: #{tpu_custom_call.1} parent=1 // pred_check_branch
      %912 = sbr.rel (0) target = $region25
    $region24: #{tpu_custom_call.1} parent=1 // pred_region
      %913 = dma.done [#allocation4], 1664
    $region25: #{tpu_custom_call.1} parent=1 // pred_fallthru
      _
    %914 = vsyncpa [#allocation3], 1
    %915 = vsyncpa [#allocation4], 1

</llo_original>
